<compile_context>
chip_gen: v5e
topology: v5e:2x2
jax: 0.10.0
libtpu: 0.0.40
codegen_flags: <defaults>
</compile_context>

<pallas_src>
import jax
import jax.numpy as jnp
from jax.experimental import pallas as pl
from jax.experimental.pallas import tpu as pltpu

Z_DIM = 64
HIDDEN = 256
IMG_DIM = 784          # img_dim arg of Generator (e.g. 28*28 MNIST image)
LANE = 128


def generator_kernel(x_ref, w1_ref, b1_ref, w2_ref, b2_ref, o_ref):
    # --- Linear(z_dim, 256): bf16 MXU matmul, f32 accumulate, f32 bias add ---
    # (If the latent z is produced in bf16 upstream, this cast is a no-op.)
    x = x_ref[...].astype(jnp.bfloat16)
    h = jnp.dot(x, w1_ref[...], preferred_element_type=jnp.float32)
    h = h + b1_ref[...]                                  # (1, HIDDEN) broadcasts over batch
    # --- LeakyReLU(0.01) in f32 on the VPU ---
    h = jnp.where(h >= 0, h, 0.01 * h)
    # --- Linear(256, img_dim_padded): bf16 MXU matmul, f32 accumulate ---
    y = jnp.dot(h.astype(jnp.bfloat16), w2_ref[...],
                preferred_element_type=jnp.float32)
    y = y + b2_ref[...]                                  # (1, OUT_PADDED)
    # --- Tanh (f32 EUP, safe on v5e), lane-dense bf16 store ---
    o_ref[...] = jnp.tanh(y).astype(o_ref.dtype)


def prepare_params(w1, b1, w2, b2):
    """One-time parameter prep — call once after init / weight update, NOT per
    forward call:
      * biases reshaped to (1, features) f32,
      * w2/b2 zero-padded along the output dim to a multiple of 128 lanes
        (784 -> 896) so kernel stores are unmasked / lane-dense,
      * weights cast to bf16 (halves the dominant HBM weight read; both dots
        still accumulate in f32 on the MXU).
    """
    out_dim = w2.shape[1]
    out_pad = (-out_dim) % LANE
    b1_f = jnp.asarray(b1, jnp.float32).reshape(1, -1)
    b2_f = jnp.asarray(b2, jnp.float32).reshape(1, -1)
    w2_f = jnp.asarray(w2, jnp.float32)
    if out_pad:
        w2_f = jnp.pad(w2_f, ((0, 0), (0, out_pad)))
        b2_f = jnp.pad(b2_f, ((0, 0), (0, out_pad)))
    return (jnp.asarray(w1, jnp.bfloat16), b1_f,
            w2_f.astype(jnp.bfloat16), b2_f)


def _pick_tile_b(batch):
    # Small batches / 1-TC chips (v5e, v6e): a single resident block avoids the
    # ~0.35 us per grid step and the pipeline fill/drain.
    # Large batches: 256-row tiles so the "parallel" batch axis can be split
    # across v7x's two TensorCores (weight DMA duplication is then amortized)
    # and the per-step VMEM footprint stays bounded.
    return batch if batch < 512 else 256


def generator_forward_padded(x, w1_b, b1, w2_b, b2_p):
    """Runs the Pallas kernel. Returns the lane-padded bf16 output
    (Bp, out_dim_padded); columns >= img_dim are tanh(0) = 0.  Slice inside
    the consuming jit (see make_generator) or consume the padded layout."""
    B, z = x.shape
    hidden = w1_b.shape[1]
    out_dim_p = w2_b.shape[1]

    tile_b = _pick_tile_b(B)
    b_pad = (-B) % tile_b
    Bp = B + b_pad
    x_p = jnp.pad(x, ((0, b_pad), (0, 0))) if b_pad else x

    grid = (Bp // tile_b,)

    flops = 2 * Bp * (z * hidden + hidden * out_dim_p)
    bytes_accessed = (x_p.size * x_p.dtype.itemsize
                      + w1_b.size * 2 + b1.size * 4
                      + w2_b.size * 2 + b2_p.size * 4
                      + Bp * out_dim_p * 2)               # bf16 output

    out = pl.pallas_call(
        generator_kernel,
        out_shape=jax.ShapeDtypeStruct((Bp, out_dim_p), jnp.bfloat16),
        grid_spec=pltpu.PrefetchScalarGridSpec(
            num_scalar_prefetch=0,
            grid=grid,
            in_specs=[
                # x: tiled along the batch axis.
                pl.BlockSpec((tile_b, z), lambda i: (i, 0)),
                # Weights / biases: same block every step -> VMEM-resident,
                # weight DMA paid once and amortized over the whole batch.
                pl.BlockSpec(w1_b.shape, lambda i: (0, 0)),
                pl.BlockSpec(b1.shape, lambda i: (0, 0)),
                pl.BlockSpec(w2_b.shape, lambda i: (0, 0)),
                pl.BlockSpec(b2_p.shape, lambda i: (0, 0)),
            ],
            out_specs=pl.BlockSpec((tile_b, out_dim_p), lambda i: (i, 0)),
        ),
        compiler_params=pltpu.CompilerParams(
            # Batch steps are independent -> shard across TCs on v7x megacore
            # (no-op when grid == (1,)).
            dimension_semantics=("parallel",),
        ),
        cost_estimate=pl.CostEstimate(
            flops=flops,
            transcendentals=Bp * out_dim_p,               # tanh
            bytes_accessed=bytes_accessed,
        ),
    )(x_p, w1_b, b1, w2_b, b2_p)
    return out


def make_generator(w1, b1, w2, b2):
    """Prep params once and return a jitted forward: x -> tanh(LeakyReLU(xW1+b1)W2+b2).
    The un-padding slice lives inside the jit so XLA can fuse/elide the copy."""
    img_dim = w2.shape[1]
    w1_b, b1_f, w2_b, b2_p = prepare_params(w1, b1, w2, b2)

    @jax.jit
    def apply(x):
        out_p = generator_forward_padded(x, w1_b, b1_f, w2_b, b2_p)
        return out_p[:x.shape[0], :img_dim]

    return apply


def init_params(key, z_dim, hidden, img_dim):
    # Deterministic synthetic init (roughly PyTorch's default uniform fan-in init).
    k1, k2, k3, k4 = jax.random.split(key, 4)
    bound1 = 1.0 / jnp.sqrt(z_dim)
    bound2 = 1.0 / jnp.sqrt(hidden)
    w1 = jax.random.uniform(k1, (z_dim, hidden), jnp.float32, -bound1, bound1)
    b1 = jax.random.uniform(k2, (hidden,), jnp.float32, -bound1, bound1)
    w2 = jax.random.uniform(k3, (hidden, img_dim), jnp.float32, -bound2, bound2)
    b2 = jax.random.uniform(k4, (img_dim,), jnp.float32, -bound2, bound2)
    return w1, b1, w2, b2


if __name__ == "__main__":
    key = jax.random.PRNGKey(0)
    k_x, k_p = jax.random.split(key)

    BATCH = 8                                             # small demo batch
    x = jax.random.normal(k_x, (BATCH, Z_DIM), jnp.float32)   # latent noise z
    w1, b1, w2, b2 = init_params(k_p, Z_DIM, HIDDEN, IMG_DIM)

    generator = make_generator(w1, b1, w2, b2)            # param prep happens once here
    out = jax.block_until_ready(generator(x))

    # Pure-JAX f32 reference of the same forward pass.
    h_ref = x @ w1 + b1[None, :]
    h_ref = jnp.where(h_ref >= 0, h_ref, 0.01 * h_ref)
    ref = jnp.tanh(h_ref @ w2 + b2[None, :])

    assert out.shape == (BATCH, IMG_DIM)
    assert out.dtype == jnp.bfloat16
    # bf16 weights + bf16 output vs. the f32 reference -> loosened tolerance.
    assert jnp.allclose(out.astype(jnp.float32), ref, atol=2e-2, rtol=2e-2)

    print("KERNEL_OK")
</pallas_src>

<mosaic_0001>
module attributes {stable_mosaic.version = 11 : i64} {
  func.func @generator_kernel(%arg0: i32, %arg1: memref<8x64xf32, #tpu.memory_space<vmem>>, %arg2: memref<64x256xbf16, #tpu.memory_space<vmem>>, %arg3: memref<1x256xf32, #tpu.memory_space<vmem>>, %arg4: memref<256x896xbf16, #tpu.memory_space<vmem>>, %arg5: memref<1x896xf32, #tpu.memory_space<vmem>>, %arg6: memref<8x896xbf16, #tpu.memory_space<vmem>>) attributes {dimension_semantics = [#tpu.dimension_semantics<parallel>], iteration_bounds = array<i64: 1>, scalar_prefetch = 0 : i64, scratch_operands = 0 : i64, tpu.core_type = #tpu.core_type<tc>, window_params = [{transform_indices = @transform_0, window_bounds = array<i64: 8, 64>}, {pipeline_mode = #tpu.pipeline_mode<synchronous>, transform_indices = @transform_1, window_bounds = array<i64: 64, 256>}, {pipeline_mode = #tpu.pipeline_mode<synchronous>, transform_indices = @transform_2, window_bounds = array<i64: 1, 256>}, {pipeline_mode = #tpu.pipeline_mode<synchronous>, transform_indices = @transform_3, window_bounds = array<i64: 256, 896>}, {pipeline_mode = #tpu.pipeline_mode<synchronous>, transform_indices = @transform_4, window_bounds = array<i64: 1, 896>}, {transform_indices = @transform_5, window_bounds = array<i64: 8, 896>}]} {
    %c0 = arith.constant 0 : index
    %c0_0 = arith.constant 0 : index
    %0 = vector.load %arg1[%c0, %c0_0] : memref<8x64xf32, #tpu.memory_space<vmem>>, vector<8x64xf32>
    %1 = arith.truncf %0 : vector<8x64xf32> to vector<8x64xbf16>
    %c0_1 = arith.constant 0 : index
    %c0_2 = arith.constant 0 : index
    %2 = vector.load %arg2[%c0_1, %c0_2] : memref<64x256xbf16, #tpu.memory_space<vmem>>, vector<64x256xbf16>
    %cst = arith.constant dense<0.000000e+00> : vector<8x256xf32>
    %3 = tpu.matmul %1, %2, %cst {dimension_numbers = #tpu.dot_dimension_numbers<[1], [0], [0], [1], [0, 0, 1, 1], [], []>} : vector<8x64xbf16>, vector<64x256xbf16>, vector<8x256xf32> -> vector<8x256xf32>
    %c0_3 = arith.constant 0 : index
    %c0_4 = arith.constant 0 : index
    %4 = vector.load %arg3[%c0_3, %c0_4] : memref<1x256xf32, #tpu.memory_space<vmem>>, vector<1x256xf32>
    %5 = vector.broadcast %4 : vector<1x256xf32> to vector<8x256xf32>
    %6 = arith.addf %3, %5 : vector<8x256xf32>
    %cst_5 = arith.constant 0.000000e+00 : f32
    %7 = vector.broadcast %cst_5 : f32 to vector<8x256xf32>
    %8 = arith.cmpf oge, %6, %7 : vector<8x256xf32>
    %cst_6 = arith.constant 0.00999999977 : f32
    %9 = vector.broadcast %cst_6 : f32 to vector<8x256xf32>
    %10 = arith.mulf %9, %6 : vector<8x256xf32>
    %11 = arith.select %8, %6, %10 : vector<8x256xi1>, vector<8x256xf32>
    %12 = arith.truncf %11 : vector<8x256xf32> to vector<8x256xbf16>
    %c0_7 = arith.constant 0 : index
    %c0_8 = arith.constant 0 : index
    %13 = vector.load %arg4[%c0_7, %c0_8] : memref<256x896xbf16, #tpu.memory_space<vmem>>, vector<256x896xbf16>
    %cst_9 = arith.constant dense<0.000000e+00> : vector<8x896xf32>
    %14 = tpu.matmul %12, %13, %cst_9 {dimension_numbers = #tpu.dot_dimension_numbers<[1], [0], [0], [1], [0, 0, 1, 1], [], []>} : vector<8x256xbf16>, vector<256x896xbf16>, vector<8x896xf32> -> vector<8x896xf32>
    %c0_10 = arith.constant 0 : index
    %c0_11 = arith.constant 0 : index
    %15 = vector.load %arg5[%c0_10, %c0_11] : memref<1x896xf32, #tpu.memory_space<vmem>>, vector<1x896xf32>
    %16 = vector.broadcast %15 : vector<1x896xf32> to vector<8x896xf32>
    %17 = arith.addf %14, %16 : vector<8x896xf32>
    %18 = math.tanh %17 : vector<8x896xf32>
    %19 = arith.truncf %18 : vector<8x896xf32> to vector<8x896xbf16>
    %c0_12 = arith.constant 0 : index
    %c0_13 = arith.constant 0 : index
    %20 = vector.load %arg6[%c0_12, %c0_13] : memref<8x896xbf16, #tpu.memory_space<vmem>>, vector<8x896xbf16>
    tpu.vector_store %arg6[%c0_12, %c0_13], %19 {strides = array<i32>} : memref<8x896xbf16, #tpu.memory_space<vmem>>, vector<8x896xbf16>,
    return
  }
  func.func @transform_0(%arg0: i32) -> (i32, i32) {
    %c0_i32 = arith.constant 0 : i32
    %c0_i32_0 = arith.constant 0 : i32
    return %arg0, %c0_i32 : i32, i32
  }
  func.func @transform_1(%arg0: i32) -> (i32, i32) {
    %c0_i32 = arith.constant 0 : i32
    %c0_i32_0 = arith.constant 0 : i32
    %c0_i32_1 = arith.constant 0 : i32
    return %c0_i32, %c0_i32_0 : i32, i32
  }
  func.func @transform_2(%arg0: i32) -> (i32, i32) {
    %c0_i32 = arith.constant 0 : i32
    %c0_i32_0 = arith.constant 0 : i32
    %c0_i32_1 = arith.constant 0 : i32
    return %c0_i32, %c0_i32_0 : i32, i32
  }
  func.func @transform_3(%arg0: i32) -> (i32, i32) {
    %c0_i32 = arith.constant 0 : i32
    %c0_i32_0 = arith.constant 0 : i32
    %c0_i32_1 = arith.constant 0 : i32
    return %c0_i32, %c0_i32_0 : i32, i32
  }
  func.func @transform_4(%arg0: i32) -> (i32, i32) {
    %c0_i32 = arith.constant 0 : i32
    %c0_i32_0 = arith.constant 0 : i32
    %c0_i32_1 = arith.constant 0 : i32
    return %c0_i32, %c0_i32_0 : i32, i32
  }
  func.func @transform_5(%arg0: i32) -> (i32, i32) {
    %c0_i32 = arith.constant 0 : i32
    %c0_i32_0 = arith.constant 0 : i32
    return %arg0, %c0_i32 : i32, i32
  }
}

</mosaic_0001>

<llo_original>
// kernel: apply.1
$region0: #{apply.1}
  #allocation0 [shape = 'u32[]', space=smem, size = 0x4, offset = 0x4, fixed_abs, tag = 'smem constant byte address 0x4 - core index']
  #allocation1 [shape = 'u32[72,128]{1,0:T(1,128)}', space=vmem, size = 0x9000, scoped, tag = 'internal scratch']
  %s0 = inlined_call_operand.hbm [shape: f32[8,64], index: 0, kind: input, shape index: {}]
  %s1 = inlined_call_operand.hbm [shape: bf16[64,256], index: 1, kind: input, shape index: {}]
  %s2 = inlined_call_operand.hbm [shape: f32[1,256], index: 2, kind: input, shape index: {}]
  %s3 = inlined_call_operand.hbm [shape: bf16[256,896], index: 3, kind: input, shape index: {}]
  %s4 = inlined_call_operand.hbm [shape: f32[1,896], index: 4, kind: input, shape index: {}]
  %s5 = inlined_call_operand.hbm [shape: bf16[8,896], index: 5, kind: output, shape index: {}]
  %s6 = sld [smem:[#allocation0]]
  $region50: #{apply.1} parent=0
    _
  %s8 = ssub.s32 1, %s6
  %s9 = scalar_select 0, %s8, %s6
  $region1: #{apply.1} parent=0
    #allocation2 [shape = 'u8[4096]{0}', space=vmem, size = 0x1000, scoped, tag = 'input window, operand 0, single buffered']
    #allocation3 [shape = 's32[1]{0}', space=sflag, size = 0x4, scoped, tag = 'scoped memory for apply.1']
    #allocation4 [shape = 's32[1]{0}', space=sflag, size = 0x4, scoped, tag = 'scoped memory for apply.1']
    #allocation5 [shape = 'u8[32768]{0}', space=vmem, size = 0x8000, scoped, tag = 'input window, operand 1, single buffered']
    #allocation6 [shape = 's32[1]{0}', space=sflag, size = 0x4, scoped, tag = 'scoped memory for apply.1']
    #allocation7 [shape = 'u8[1024]{0}', space=vmem, size = 0x400, scoped, tag = 'input window, operand 2, single buffered']
    #allocation8 [shape = 'u8[458752]{0}', space=vmem, size = 0x70000, scoped, tag = 'input window, operand 3, single buffered']
    #allocation9 [shape = 's32[1]{0}', space=sflag, size = 0x4, scoped, tag = 'scoped memory for apply.1']
    #allocation10 [shape = 'u8[3584]{0}', space=vmem, size = 0x1000, scoped, tag = 'input window, operand 4, single buffered']
    #allocation11 [shape = 'u8[14336]{0}', space=vmem, size = 0x3800, scoped, tag = 'output window, operand 0, single buffered']
    %10 = vsyncpa [#allocation3], 0
    %11 = vsyncpa [#allocation6], 0
    %12 = vsyncpa [#allocation9], 0
    %13 = vsyncpa [#allocation4], 0
    // Predicated region
    $region2: #{apply.1} parent=1 // pred_check
      _
    $region3: #{apply.1} parent=1 // pred_check_branch
      %15 = sbr.rel (0) target = $region5
    $region4: #{apply.1} parent=1 // pred_region
      %17 = vsyncadd [#allocation3], 0
      %s19 = sshll.u32 %s0, 4
      %s20 = int_to_ptr.hbm [resolvable:$true] %s19
      %s21 = sshll.u32 [#allocation2], 4
      %s22 = int_to_ptr.vmem [resolvable:$true] %s21
      %24 = dma.hbm_to_vmem [thread:$0]  %s20, 128, %s22, [#allocation3]
    $region5: #{apply.1} parent=1 // pred_fallthru
      _
    // Predicated region
    $region6: #{apply.1} parent=1 // pred_check
      _
    $region7: #{apply.1} parent=1 // pred_check_branch
      %26 = sbr.rel (0) target = $region9
    $region8: #{apply.1} parent=1 // pred_region
      %28 = vsyncadd [#allocation6], 0
      %s29 = sshll.u32 %s1, 4
      %s30 = int_to_ptr.hbm [resolvable:$true] %s29
      %s31 = sshll.u32 [#allocation5], 4
      %s32 = int_to_ptr.vmem [resolvable:$true] %s31
      %37 = dma.hbm_to_vmem [thread:$0]  %s30, 1024, %s32, [#allocation6], 128, 128, 8
    $region9: #{apply.1} parent=1 // pred_fallthru
      _
    // Predicated region
    $region10: #{apply.1} parent=1 // pred_check
      _
    $region11: #{apply.1} parent=1 // pred_check_branch
      %39 = sbr.rel (0) target = $region13
    $region12: #{apply.1} parent=1 // pred_region
      %41 = vsyncadd [#allocation6], 0
      %s43 = sshll.u32 %s2, 4
      %s44 = int_to_ptr.hbm [resolvable:$true] %s43
      %s45 = sshll.u32 [#allocation7], 4
      %s46 = int_to_ptr.vmem [resolvable:$true] %s45
      %48 = dma.hbm_to_vmem [thread:$0]  %s44, 32, %s46, [#allocation6]
    $region13: #{apply.1} parent=1 // pred_fallthru
      _
    // Predicated region
    $region14: #{apply.1} parent=1 // pred_check
      _
    $region15: #{apply.1} parent=1 // pred_check_branch
      %50 = sbr.rel (0) target = $region17
    $region16: #{apply.1} parent=1 // pred_region
      %52 = vsyncadd [#allocation9], 0
      %s53 = sshll.u32 %s3, 4
      %s54 = int_to_ptr.hbm [resolvable:$true] %s53
      %s55 = sshll.u32 [#allocation8], 4
      %s56 = int_to_ptr.vmem [resolvable:$true] %s55
      %61 = dma.hbm_to_vmem [thread:$0]  %s54, 14336, %s56, [#allocation9], 448, 448, 28
    $region17: #{apply.1} parent=1 // pred_fallthru
      _
    // Predicated region
    $region18: #{apply.1} parent=1 // pred_check
      _
    $region19: #{apply.1} parent=1 // pred_check_branch
      %63 = sbr.rel (0) target = $region21
    $region20: #{apply.1} parent=1 // pred_region
      %65 = vsyncadd [#allocation9], 0
      %s67 = sshll.u32 %s4, 4
      %s68 = int_to_ptr.hbm [resolvable:$true] %s67
      %s69 = sshll.u32 [#allocation10], 4
      %s70 = int_to_ptr.vmem [resolvable:$true] %s69
      %72 = dma.hbm_to_vmem [thread:$0]  %s68, 112, %s70, [#allocation9]
    $region21: #{apply.1} parent=1 // pred_fallthru
      _
    // Predicated region
    $region22: #{apply.1} parent=1 // pred_check
      _
    $region23: #{apply.1} parent=1 // pred_check_branch
      %74 = sbr.rel (0) target = $region25
    $region24: #{apply.1} parent=1 // pred_region
      %76 = dma.done [#allocation3], 128
    $region25: #{apply.1} parent=1 // pred_fallthru
      _
    // Predicated region
    $region26: #{apply.1} parent=1 // pred_check
      _
    $region27: #{apply.1} parent=1 // pred_check_branch
      %78 = sbr.rel (0) target = $region29
    $region28: #{apply.1} parent=1 // pred_region
      %80 = dma.done [#allocation6], 1024
    $region29: #{apply.1} parent=1 // pred_fallthru
      _
    // Predicated region
    $region30: #{apply.1} parent=1 // pred_check
      _
    $region31: #{apply.1} parent=1 // pred_check_branch
      %82 = sbr.rel (0) target = $region33
    $region32: #{apply.1} parent=1 // pred_region
      %84 = dma.done [#allocation6], 32
    $region33: #{apply.1} parent=1 // pred_fallthru
      _
    // Predicated region
    $region34: #{apply.1} parent=1 // pred_check
      _
    $region35: #{apply.1} parent=1 // pred_check_branch
      %86 = sbr.rel (0) target = $region37
    $region36: #{apply.1} parent=1 // pred_region
      %88 = dma.done [#allocation9], 14336
    $region37: #{apply.1} parent=1 // pred_fallthru
      _
    // Predicated region
    $region38: #{apply.1} parent=1 // pred_check
      _
    $region39: #{apply.1} parent=1 // pred_check_branch
      %90 = sbr.rel (0) target = $region41
    $region40: #{apply.1} parent=1 // pred_region
      %92 = dma.done [#allocation9], 112
    $region41: #{apply.1} parent=1 // pred_fallthru
      _
    %v94 = vld [vmem:[#allocation2] sm:$0xff]
    %v95 = vpack.c.bf16 %v94, %v94
    %v96 = vld [vmem:[#allocation5] sm:$0xff]
    %v97 = vld [vmem:[#allocation5 + $0x8] sm:$0xff]
    %v98 = vld [vmem:[#allocation5 + $0x10] sm:$0xff]
    %v99 = vld [vmem:[#allocation5 + $0x18] sm:$0xff]
    %v100 = vld [vmem:[#allocation5 + $0x20] sm:$0xff]
    %v101 = vld [vmem:[#allocation5 + $0x28] sm:$0xff]
    %v102 = vld [vmem:[#allocation5 + $0x30] sm:$0xff]
    %v103 = vld [vmem:[#allocation5 + $0x38] sm:$0xff]
    %v104 = vld [vmem:[#allocation7] sm:$0x3]
    %v106 = vperm.slane %v104, 0
    %v107 = vperm.slane %v104, 1
    %v118 = vunpack.c.l.b16 %v96
    %v119 = vunpack.c.h.b16 %v96
    %v120 = vunpack.c.l.b16 %v97
    %v121 = vunpack.c.h.b16 %v97
    %v122 = vunpack.c.l.b16 %v98
    %v123 = vunpack.c.h.b16 %v98
    %v124 = vunpack.c.l.b16 %v99
    %v125 = vunpack.c.h.b16 %v99
    %v126 = vunpack.c.l.b16 %v100
    %v127 = vunpack.c.h.b16 %v100
    %v128 = vunpack.c.l.b16 %v101
    %v129 = vunpack.c.h.b16 %v101
    %v130 = vunpack.c.l.b16 %v102
    %v131 = vunpack.c.h.b16 %v102
    %v132 = vunpack.c.l.b16 %v103
    %v133 = vunpack.c.h.b16 %v103
    %v134 = vpack.c.b16 %v120, %v118
    %v135 = vpack.c.b16 %v121, %v119
    %v136 = vpack.c.b16 %v124, %v122
    %v137 = vpack.c.b16 %v125, %v123
    %v138 = vpack.c.b16 %v128, %v126
    %v139 = vpack.c.b16 %v129, %v127
    %v140 = vpack.c.b16 %v132, %v130
    %v141 = vpack.c.b16 %v133, %v131
    %vm150 = vcmask 523264
    %v152 = vsel %vm150, %v95, 0
    %154 = vmatpush.bf16.msra.mxu0 0
    %155 = vmatpush.bf16.msra.mxu0 0
    %156 = vmatpush.bf16.msra.mxu0 0
    %157 = vmatpush.bf16.msra.mxu0 0
    %158 = vmatpush.bf16.msra.mxu0 %v140
    %159 = vmatpush.bf16.msra.mxu0 %v138
    %160 = vmatpush.bf16.msra.mxu0 %v136
    %161 = vmatpush.bf16.msra.mxu0 %v134
    %162 = vmatmul.bf16.gmra.mxu0 %v152
    %v163 = vpop.f32.mrf.mxu0
    %v164 = vadd.f32 %v106, %v163
    %v165 = vpop.f32.mrf.mxu0
    %166 = vdwg.mxu0
    %167 = vmatpush.bf16.msra.mxu0 0
    %168 = vmatpush.bf16.msra.mxu0 0
    %169 = vmatpush.bf16.msra.mxu0 0
    %170 = vmatpush.bf16.msra.mxu0 0
    %171 = vmatpush.bf16.msra.mxu0 %v141
    %172 = vmatpush.bf16.msra.mxu0 %v139
    %173 = vmatpush.bf16.msra.mxu0 %v137
    %174 = vmatpush.bf16.msra.mxu0 %v135
    %175 = vmatmul.bf16.gmra.mxu0 %v152
    %v176 = vpop.f32.mrf.mxu0
    %v177 = vadd.f32 %v107, %v176
    %v178 = vpop.f32.mrf.mxu0
    %179 = vdwg.mxu0
    %vm180 = vcmp.ge.f32.partialorder %v164, 0.0
    %vm181 = vcmp.ge.f32.partialorder %v177, 0.0
    %v182 = vmul.f32 %v164, 0.01
    %v183 = vmul.f32 %v177, 0.01
    %v184 = vsel %vm180, %v164, %v182
    %v185 = vsel %vm181, %v177, %v183
    %v186 = vpack.c.bf16 %v184, %v184
    %v187 = vpack.c.bf16 %v185, %v185
    %v188 = vld [vmem:[#allocation8] sm:$0xff]
    %v189 = vld [vmem:[#allocation8 + $0x8] sm:$0xff]
    %v190 = vld [vmem:[#allocation8 + $0x10] sm:$0xff]
    %v191 = vld [vmem:[#allocation8 + $0x18] sm:$0xf]
    %v192 = vld [vmem:[#allocation8 + $0x1c] sm:$0xff]
    %v193 = vld [vmem:[#allocation8 + $0x24] sm:$0xff]
    %v194 = vld [vmem:[#allocation8 + $0x2c] sm:$0xff]
    %v195 = vld [vmem:[#allocation8 + $0x34] sm:$0xf]
    %v196 = vld [vmem:[#allocation8 + $0x38] sm:$0xff]
    %v197 = vld [vmem:[#allocation8 + $0x40] sm:$0xff]
    %v198 = vld [vmem:[#allocation8 + $0x48] sm:$0xff]
    %v199 = vld [vmem:[#allocation8 + $0x50] sm:$0xf]
    %v200 = vld [vmem:[#allocation8 + $0x54] sm:$0xff]
    %v201 = vld [vmem:[#allocation8 + $0x5c] sm:$0xff]
    %v202 = vld [vmem:[#allocation8 + $0x64] sm:$0xff]
    %v203 = vld [vmem:[#allocation8 + $0x6c] sm:$0xf]
    %v204 = vld [vmem:[#allocation8 + $0x70] sm:$0xff]
    %v205 = vld [vmem:[#allocation8 + $0x78] sm:$0xff]
    %v206 = vld [vmem:[#allocation8 + $0x80] sm:$0xff]
    %v207 = vld [vmem:[#allocation8 + $0x88] sm:$0xf]
    %v208 = vld [vmem:[#allocation8 + $0x8c] sm:$0xff]
    %v209 = vld [vmem:[#allocation8 + $0x94] sm:$0xff]
    %v210 = vld [vmem:[#allocation8 + $0x9c] sm:$0xff]
    %v211 = vld [vmem:[#allocation8 + $0xa4] sm:$0xf]
    %v212 = vld [vmem:[#allocation8 + $0xa8] sm:$0xff]
    %v213 = vld [vmem:[#allocation8 + $0xb0] sm:$0xff]
    %v214 = vld [vmem:[#allocation8 + $0xb8] sm:$0xff]
    %v215 = vld [vmem:[#allocation8 + $0xc0] sm:$0xf]
    %v216 = vld [vmem:[#allocation8 + $0xc4] sm:$0xff]
    %v217 = vld [vmem:[#allocation8 + $0xcc] sm:$0xff]
    %v218 = vld [vmem:[#allocation8 + $0xd4] sm:$0xff]
    %v219 = vld [vmem:[#allocation8 + $0xdc] sm:$0xf]
    %v220 = vld [vmem:[#allocation8 + $0xe0] sm:$0xff]
    %v221 = vld [vmem:[#allocation8 + $0xe8] sm:$0xff]
    %v222 = vld [vmem:[#allocation8 + $0xf0] sm:$0xff]
    %v223 = vld [vmem:[#allocation8 + $0xf8] sm:$0xf]
    %v224 = vld [vmem:[#allocation8 + $0xfc] sm:$0xff]
    %v225 = vld [vmem:[#allocation8 + $0x104] sm:$0xff]
    %v226 = vld [vmem:[#allocation8 + $0x10c] sm:$0xff]
    %v227 = vld [vmem:[#allocation8 + $0x114] sm:$0xf]
    %v228 = vld [vmem:[#allocation8 + $0x118] sm:$0xff]
    %v229 = vld [vmem:[#allocation8 + $0x120] sm:$0xff]
    %v230 = vld [vmem:[#allocation8 + $0x128] sm:$0xff]
    %v231 = vld [vmem:[#allocation8 + $0x130] sm:$0xf]
    %v232 = vld [vmem:[#allocation8 + $0x134] sm:$0xff]
    %v233 = vld [vmem:[#allocation8 + $0x13c] sm:$0xff]
    %v234 = vld [vmem:[#allocation8 + $0x144] sm:$0xff]
    %v235 = vld [vmem:[#allocation8 + $0x14c] sm:$0xf]
    %v236 = vld [vmem:[#allocation8 + $0x150] sm:$0xff]
    %v237 = vld [vmem:[#allocation8 + $0x158] sm:$0xff]
    %v238 = vld [vmem:[#allocation8 + $0x160] sm:$0xff]
    %v239 = vld [vmem:[#allocation8 + $0x168] sm:$0xf]
    %v240 = vld [vmem:[#allocation8 + $0x16c] sm:$0xff]
    %v241 = vld [vmem:[#allocation8 + $0x174] sm:$0xff]
    %v242 = vld [vmem:[#allocation8 + $0x17c] sm:$0xff]
    %v243 = vld [vmem:[#allocation8 + $0x184] sm:$0xf]
    %v244 = vld [vmem:[#allocation8 + $0x188] sm:$0xff]
    %v245 = vld [vmem:[#allocation8 + $0x190] sm:$0xff]
    %v246 = vld [vmem:[#allocation8 + $0x198] sm:$0xff]
    %v247 = vld [vmem:[#allocation8 + $0x1a0] sm:$0xf]
    %v248 = vld [vmem:[#allocation8 + $0x1a4] sm:$0xff]
    %v249 = vld [vmem:[#allocation8 + $0x1ac] sm:$0xff]
    %v250 = vld [vmem:[#allocation8 + $0x1b4] sm:$0xff]
    %v251 = vld [vmem:[#allocation8 + $0x1bc] sm:$0xf]
    %v252 = vld [vmem:[#allocation8 + $0x1c0] sm:$0xff]
    %v253 = vld [vmem:[#allocation8 + $0x1c8] sm:$0xff]
    %v254 = vld [vmem:[#allocation8 + $0x1d0] sm:$0xff]
    %v255 = vld [vmem:[#allocation8 + $0x1d8] sm:$0xf]
    %v256 = vld [vmem:[#allocation8 + $0x1dc] sm:$0xff]
    %v257 = vld [vmem:[#allocation8 + $0x1e4] sm:$0xff]
    %v258 = vld [vmem:[#allocation8 + $0x1ec] sm:$0xff]
    %v259 = vld [vmem:[#allocation8 + $0x1f4] sm:$0xf]
    %v260 = vld [vmem:[#allocation8 + $0x1f8] sm:$0xff]
    %v261 = vld [vmem:[#allocation8 + $0x200] sm:$0xff]
    %v262 = vld [vmem:[#allocation8 + $0x208] sm:$0xff]
    %v263 = vld [vmem:[#allocation8 + $0x210] sm:$0xf]
    %v264 = vld [vmem:[#allocation8 + $0x214] sm:$0xff]
    %v265 = vld [vmem:[#allocation8 + $0x21c] sm:$0xff]
    %v266 = vld [vmem:[#allocation8 + $0x224] sm:$0xff]
    %v267 = vld [vmem:[#allocation8 + $0x22c] sm:$0xf]
    %v268 = vld [vmem:[#allocation8 + $0x230] sm:$0xff]
    %v269 = vld [vmem:[#allocation8 + $0x238] sm:$0xff]
    %v270 = vld [vmem:[#allocation8 + $0x240] sm:$0xff]
    %v271 = vld [vmem:[#allocation8 + $0x248] sm:$0xf]
    %v272 = vld [vmem:[#allocation8 + $0x24c] sm:$0xff]
    %v273 = vld [vmem:[#allocation8 + $0x254] sm:$0xff]
    %v274 = vld [vmem:[#allocation8 + $0x25c] sm:$0xff]
    %v275 = vld [vmem:[#allocation8 + $0x264] sm:$0xf]
    %v276 = vld [vmem:[#allocation8 + $0x268] sm:$0xff]
    %v277 = vld [vmem:[#allocation8 + $0x270] sm:$0xff]
    %v278 = vld [vmem:[#allocation8 + $0x278] sm:$0xff]
    %v279 = vld [vmem:[#allocation8 + $0x280] sm:$0xf]
    %v280 = vld [vmem:[#allocation8 + $0x284] sm:$0xff]
    %v281 = vld [vmem:[#allocation8 + $0x28c] sm:$0xff]
    %v282 = vld [vmem:[#allocation8 + $0x294] sm:$0xff]
    %v283 = vld [vmem:[#allocation8 + $0x29c] sm:$0xf]
    %v284 = vld [vmem:[#allocation8 + $0x2a0] sm:$0xff]
    %v285 = vld [vmem:[#allocation8 + $0x2a8] sm:$0xff]
    %v286 = vld [vmem:[#allocation8 + $0x2b0] sm:$0xff]
    %v287 = vld [vmem:[#allocation8 + $0x2b8] sm:$0xf]
    %v288 = vld [vmem:[#allocation8 + $0x2bc] sm:$0xff]
    %v289 = vld [vmem:[#allocation8 + $0x2c4] sm:$0xff]
    %v290 = vld [vmem:[#allocation8 + $0x2cc] sm:$0xff]
    %v291 = vld [vmem:[#allocation8 + $0x2d4] sm:$0xf]
    %v292 = vld [vmem:[#allocation8 + $0x2d8] sm:$0xff]
    %v293 = vld [vmem:[#allocation8 + $0x2e0] sm:$0xff]
    %v294 = vld [vmem:[#allocation8 + $0x2e8] sm:$0xff]
    %v295 = vld [vmem:[#allocation8 + $0x2f0] sm:$0xf]
    %v296 = vld [vmem:[#allocation8 + $0x2f4] sm:$0xff]
    %v297 = vld [vmem:[#allocation8 + $0x2fc] sm:$0xff]
    %v298 = vld [vmem:[#allocation8 + $0x304] sm:$0xff]
    %v299 = vld [vmem:[#allocation8 + $0x30c] sm:$0xf]
    %v300 = vld [vmem:[#allocation8 + $0x310] sm:$0xff]
    %v301 = vld [vmem:[#allocation8 + $0x318] sm:$0xff]
    %v302 = vld [vmem:[#allocation8 + $0x320] sm:$0xff]
    %v303 = vld [vmem:[#allocation8 + $0x328] sm:$0xf]
    %v304 = vld [vmem:[#allocation8 + $0x32c] sm:$0xff]
    %v305 = vld [vmem:[#allocation8 + $0x334] sm:$0xff]
    %v306 = vld [vmem:[#allocation8 + $0x33c] sm:$0xff]
    %v307 = vld [vmem:[#allocation8 + $0x344] sm:$0xf]
    %v308 = vld [vmem:[#allocation8 + $0x348] sm:$0xff]
    %v309 = vld [vmem:[#allocation8 + $0x350] sm:$0xff]
    %v310 = vld [vmem:[#allocation8 + $0x358] sm:$0xff]
    %v311 = vld [vmem:[#allocation8 + $0x360] sm:$0xf]
    %v312 = vld [vmem:[#allocation8 + $0x364] sm:$0xff]
    %v313 = vld [vmem:[#allocation8 + $0x36c] sm:$0xff]
    %v314 = vld [vmem:[#allocation8 + $0x374] sm:$0xff]
    %v315 = vld [vmem:[#allocation8 + $0x37c] sm:$0xf]
    %v316 = vld [vmem:[#allocation10] sm:$0xff]
    %v318 = vperm.slane %v316, 0
    %v319 = vperm.slane %v316, 1
    %v320 = vperm.slane %v316, 2
    %v321 = vperm.slane %v316, 3
    %v322 = vperm.slane %v316, 4
    %v323 = vperm.slane %v316, 5
    %v324 = vperm.slane %v316, 6
    %v460 = vunpack.c.l.b16 %v188
    %v461 = vunpack.c.h.b16 %v188
    %v462 = vunpack.c.l.b16 %v189
    %v463 = vunpack.c.h.b16 %v189
    %v464 = vunpack.c.l.b16 %v190
    %v465 = vunpack.c.h.b16 %v190
    %v466 = vunpack.c.l.b16 %v191
    %v467 = vunpack.c.l.b16 %v192
    %v468 = vunpack.c.h.b16 %v192
    %v469 = vunpack.c.l.b16 %v193
    %v470 = vunpack.c.h.b16 %v193
    %v471 = vunpack.c.l.b16 %v194
    %v472 = vunpack.c.h.b16 %v194
    %v473 = vunpack.c.l.b16 %v195
    %v474 = vunpack.c.l.b16 %v196
    %v475 = vunpack.c.h.b16 %v196
    %v476 = vunpack.c.l.b16 %v197
    %v477 = vunpack.c.h.b16 %v197
    %v478 = vunpack.c.l.b16 %v198
    %v479 = vunpack.c.h.b16 %v198
    %v480 = vunpack.c.l.b16 %v199
    %v481 = vunpack.c.l.b16 %v200
    %v482 = vunpack.c.h.b16 %v200
    %v483 = vunpack.c.l.b16 %v201
    %v484 = vunpack.c.h.b16 %v201
    %v485 = vunpack.c.l.b16 %v202
    %v486 = vunpack.c.h.b16 %v202
    %v487 = vunpack.c.l.b16 %v203
    %v488 = vunpack.c.l.b16 %v204
    %v489 = vunpack.c.h.b16 %v204
    %v490 = vunpack.c.l.b16 %v205
    %v491 = vunpack.c.h.b16 %v205
    %v492 = vunpack.c.l.b16 %v206
    %v493 = vunpack.c.h.b16 %v206
    %v494 = vunpack.c.l.b16 %v207
    %v495 = vunpack.c.l.b16 %v208
    %v496 = vunpack.c.h.b16 %v208
    %v497 = vunpack.c.l.b16 %v209
    %v498 = vunpack.c.h.b16 %v209
    %v499 = vunpack.c.l.b16 %v210
    %v500 = vunpack.c.h.b16 %v210
    %v501 = vunpack.c.l.b16 %v211
    %v502 = vunpack.c.l.b16 %v212
    %v503 = vunpack.c.h.b16 %v212
    %v504 = vunpack.c.l.b16 %v213
    %v505 = vunpack.c.h.b16 %v213
    %v506 = vunpack.c.l.b16 %v214
    %v507 = vunpack.c.h.b16 %v214
    %v508 = vunpack.c.l.b16 %v215
    %v509 = vunpack.c.l.b16 %v216
    %v510 = vunpack.c.h.b16 %v216
    %v511 = vunpack.c.l.b16 %v217
    %v512 = vunpack.c.h.b16 %v217
    %v513 = vunpack.c.l.b16 %v218
    %v514 = vunpack.c.h.b16 %v218
    %v515 = vunpack.c.l.b16 %v219
    %v516 = vunpack.c.l.b16 %v220
    %v517 = vunpack.c.h.b16 %v220
    %v518 = vunpack.c.l.b16 %v221
    %v519 = vunpack.c.h.b16 %v221
    %v520 = vunpack.c.l.b16 %v222
    %v521 = vunpack.c.h.b16 %v222
    %v522 = vunpack.c.l.b16 %v223
    %v523 = vunpack.c.l.b16 %v224
    %v524 = vunpack.c.h.b16 %v224
    %v525 = vunpack.c.l.b16 %v225
    %v526 = vunpack.c.h.b16 %v225
    %v527 = vunpack.c.l.b16 %v226
    %v528 = vunpack.c.h.b16 %v226
    %v529 = vunpack.c.l.b16 %v227
    %v530 = vunpack.c.l.b16 %v228
    %v531 = vunpack.c.h.b16 %v228
    %v532 = vunpack.c.l.b16 %v229
    %v533 = vunpack.c.h.b16 %v229
    %v534 = vunpack.c.l.b16 %v230
    %v535 = vunpack.c.h.b16 %v230
    %v536 = vunpack.c.l.b16 %v231
    %v537 = vunpack.c.l.b16 %v232
    %v538 = vunpack.c.h.b16 %v232
    %v539 = vunpack.c.l.b16 %v233
    %v540 = vunpack.c.h.b16 %v233
    %v541 = vunpack.c.l.b16 %v234
    %v542 = vunpack.c.h.b16 %v234
    %v543 = vunpack.c.l.b16 %v235
    %v544 = vunpack.c.l.b16 %v236
    %v545 = vunpack.c.h.b16 %v236
    %v546 = vunpack.c.l.b16 %v237
    %v547 = vunpack.c.h.b16 %v237
    %v548 = vunpack.c.l.b16 %v238
    %v549 = vunpack.c.h.b16 %v238
    %v550 = vunpack.c.l.b16 %v239
    %v551 = vunpack.c.l.b16 %v240
    %v552 = vunpack.c.h.b16 %v240
    %v553 = vunpack.c.l.b16 %v241
    %v554 = vunpack.c.h.b16 %v241
    %v555 = vunpack.c.l.b16 %v242
    %v556 = vunpack.c.h.b16 %v242
    %v557 = vunpack.c.l.b16 %v243
    %v558 = vunpack.c.l.b16 %v244
    %v559 = vunpack.c.h.b16 %v244
    %v560 = vunpack.c.l.b16 %v245
    %v561 = vunpack.c.h.b16 %v245
    %v562 = vunpack.c.l.b16 %v246
    %v563 = vunpack.c.h.b16 %v246
    %v564 = vunpack.c.l.b16 %v247
    %v565 = vunpack.c.l.b16 %v248
    %v566 = vunpack.c.h.b16 %v248
    %v567 = vunpack.c.l.b16 %v249
    %v568 = vunpack.c.h.b16 %v249
    %v569 = vunpack.c.l.b16 %v250
    %v570 = vunpack.c.h.b16 %v250
    %v571 = vunpack.c.l.b16 %v251
    %v572 = vunpack.c.l.b16 %v252
    %v573 = vunpack.c.h.b16 %v252
    %v574 = vunpack.c.l.b16 %v253
    %v575 = vunpack.c.h.b16 %v253
    %v576 = vunpack.c.l.b16 %v254
    %v577 = vunpack.c.h.b16 %v254
    %v578 = vunpack.c.l.b16 %v255
    %v579 = vunpack.c.l.b16 %v256
    %v580 = vunpack.c.h.b16 %v256
    %v581 = vunpack.c.l.b16 %v257
    %v582 = vunpack.c.h.b16 %v257
    %v583 = vunpack.c.l.b16 %v258
    %v584 = vunpack.c.h.b16 %v258
    %v585 = vunpack.c.l.b16 %v259
    %v586 = vunpack.c.l.b16 %v260
    %v587 = vunpack.c.h.b16 %v260
    %v588 = vunpack.c.l.b16 %v261
    %v589 = vunpack.c.h.b16 %v261
    %v590 = vunpack.c.l.b16 %v262
    %v591 = vunpack.c.h.b16 %v262
    %v592 = vunpack.c.l.b16 %v263
    %v593 = vunpack.c.l.b16 %v264
    %v594 = vunpack.c.h.b16 %v264
    %v595 = vunpack.c.l.b16 %v265
    %v596 = vunpack.c.h.b16 %v265
    %v597 = vunpack.c.l.b16 %v266
    %v598 = vunpack.c.h.b16 %v266
    %v599 = vunpack.c.l.b16 %v267
    %v600 = vunpack.c.l.b16 %v268
    %v601 = vunpack.c.h.b16 %v268
    %v602 = vunpack.c.l.b16 %v269
    %v603 = vunpack.c.h.b16 %v269
    %v604 = vunpack.c.l.b16 %v270
    %v605 = vunpack.c.h.b16 %v270
    %v606 = vunpack.c.l.b16 %v271
    %v607 = vunpack.c.l.b16 %v272
    %v608 = vunpack.c.h.b16 %v272
    %v609 = vunpack.c.l.b16 %v273
    %v610 = vunpack.c.h.b16 %v273
    %v611 = vunpack.c.l.b16 %v274
    %v612 = vunpack.c.h.b16 %v274
    %v613 = vunpack.c.l.b16 %v275
    %v614 = vunpack.c.l.b16 %v276
    %v615 = vunpack.c.h.b16 %v276
    %v616 = vunpack.c.l.b16 %v277
    %v617 = vunpack.c.h.b16 %v277
    %v618 = vunpack.c.l.b16 %v278
    %v619 = vunpack.c.h.b16 %v278
    %v620 = vunpack.c.l.b16 %v279
    %v621 = vunpack.c.l.b16 %v280
    %v622 = vunpack.c.h.b16 %v280
    %v623 = vunpack.c.l.b16 %v281
    %v624 = vunpack.c.h.b16 %v281
    %v625 = vunpack.c.l.b16 %v282
    %v626 = vunpack.c.h.b16 %v282
    %v627 = vunpack.c.l.b16 %v283
    %v628 = vunpack.c.l.b16 %v284
    %v629 = vunpack.c.h.b16 %v284
    %v630 = vunpack.c.l.b16 %v285
    %v631 = vunpack.c.h.b16 %v285
    %v632 = vunpack.c.l.b16 %v286
    %v633 = vunpack.c.h.b16 %v286
    %v634 = vunpack.c.l.b16 %v287
    %v635 = vunpack.c.l.b16 %v288
    %v636 = vunpack.c.h.b16 %v288
    %v637 = vunpack.c.l.b16 %v289
    %v638 = vunpack.c.h.b16 %v289
    %v639 = vunpack.c.l.b16 %v290
    %v640 = vunpack.c.h.b16 %v290
    %v641 = vunpack.c.l.b16 %v291
    %v642 = vunpack.c.l.b16 %v292
    %v643 = vunpack.c.h.b16 %v292
    %v644 = vunpack.c.l.b16 %v293
    %v645 = vunpack.c.h.b16 %v293
    %v646 = vunpack.c.l.b16 %v294
    %v647 = vunpack.c.h.b16 %v294
    %v648 = vunpack.c.l.b16 %v295
    %v649 = vunpack.c.l.b16 %v296
    %v650 = vunpack.c.h.b16 %v296
    %v651 = vunpack.c.l.b16 %v297
    %v652 = vunpack.c.h.b16 %v297
    %v653 = vunpack.c.l.b16 %v298
    %v654 = vunpack.c.h.b16 %v298
    %v655 = vunpack.c.l.b16 %v299
    %v656 = vunpack.c.l.b16 %v300
    %v657 = vunpack.c.h.b16 %v300
    %v658 = vunpack.c.l.b16 %v301
    %v659 = vunpack.c.h.b16 %v301
    %v660 = vunpack.c.l.b16 %v302
    %v661 = vunpack.c.h.b16 %v302
    %v662 = vunpack.c.l.b16 %v303
    %v663 = vunpack.c.l.b16 %v304
    %v664 = vunpack.c.h.b16 %v304
    %v665 = vunpack.c.l.b16 %v305
    %v666 = vunpack.c.h.b16 %v305
    %v667 = vunpack.c.l.b16 %v306
    %v668 = vunpack.c.h.b16 %v306
    %v669 = vunpack.c.l.b16 %v307
    %v670 = vunpack.c.l.b16 %v308
    %v671 = vunpack.c.h.b16 %v308
    %v672 = vunpack.c.l.b16 %v309
    %v673 = vunpack.c.h.b16 %v309
    %v674 = vunpack.c.l.b16 %v310
    %v675 = vunpack.c.h.b16 %v310
    %v676 = vunpack.c.l.b16 %v311
    %v677 = vunpack.c.l.b16 %v312
    %v678 = vunpack.c.h.b16 %v312
    %v679 = vunpack.c.l.b16 %v313
    %v680 = vunpack.c.h.b16 %v313
    %v681 = vunpack.c.l.b16 %v314
    %v682 = vunpack.c.h.b16 %v314
    %v683 = vunpack.c.l.b16 %v315
    %v684 = vpack.c.b16 %v467, %v460
    %v685 = vpack.c.b16 %v468, %v461
    %v686 = vpack.c.b16 %v469, %v462
    %v687 = vpack.c.b16 %v470, %v463
    %v688 = vpack.c.b16 %v471, %v464
    %v689 = vpack.c.b16 %v472, %v465
    %v690 = vpack.c.b16 %v473, %v466
    %v691 = vpack.c.b16 %v481, %v474
    %v692 = vpack.c.b16 %v482, %v475
    %v693 = vpack.c.b16 %v483, %v476
    %v694 = vpack.c.b16 %v484, %v477
    %v695 = vpack.c.b16 %v485, %v478
    %v696 = vpack.c.b16 %v486, %v479
    %v697 = vpack.c.b16 %v487, %v480
    %v698 = vpack.c.b16 %v495, %v488
    %v699 = vpack.c.b16 %v496, %v489
    %v700 = vpack.c.b16 %v497, %v490
    %v701 = vpack.c.b16 %v498, %v491
    %v702 = vpack.c.b16 %v499, %v492
    %v703 = vpack.c.b16 %v500, %v493
    %v704 = vpack.c.b16 %v501, %v494
    %v705 = vpack.c.b16 %v509, %v502
    %v706 = vpack.c.b16 %v510, %v503
    %v707 = vpack.c.b16 %v511, %v504
    %v708 = vpack.c.b16 %v512, %v505
    %v709 = vpack.c.b16 %v513, %v506
    %v710 = vpack.c.b16 %v514, %v507
    %v711 = vpack.c.b16 %v515, %v508
    %v712 = vpack.c.b16 %v523, %v516
    %v713 = vpack.c.b16 %v524, %v517
    %v714 = vpack.c.b16 %v525, %v518
    %v715 = vpack.c.b16 %v526, %v519
    %v716 = vpack.c.b16 %v527, %v520
    %v717 = vpack.c.b16 %v528, %v521
    %v718 = vpack.c.b16 %v529, %v522
    %v719 = vpack.c.b16 %v537, %v530
    %v720 = vpack.c.b16 %v538, %v531
    %v721 = vpack.c.b16 %v539, %v532
    %v722 = vpack.c.b16 %v540, %v533
    %v723 = vpack.c.b16 %v541, %v534
    %v724 = vpack.c.b16 %v542, %v535
    %v725 = vpack.c.b16 %v543, %v536
    %v726 = vpack.c.b16 %v551, %v544
    %v727 = vpack.c.b16 %v552, %v545
    %v728 = vpack.c.b16 %v553, %v546
    %v729 = vpack.c.b16 %v554, %v547
    %v730 = vpack.c.b16 %v555, %v548
    %v731 = vpack.c.b16 %v556, %v549
    %v732 = vpack.c.b16 %v557, %v550
    %v733 = vpack.c.b16 %v565, %v558
    %v734 = vpack.c.b16 %v566, %v559
    %v735 = vpack.c.b16 %v567, %v560
    %v736 = vpack.c.b16 %v568, %v561
    %v737 = vpack.c.b16 %v569, %v562
    %v738 = vpack.c.b16 %v570, %v563
    %v739 = vpack.c.b16 %v571, %v564
    %v740 = vpack.c.b16 %v579, %v572
    %v741 = vpack.c.b16 %v580, %v573
    %v742 = vpack.c.b16 %v581, %v574
    %v743 = vpack.c.b16 %v582, %v575
    %v744 = vpack.c.b16 %v583, %v576
    %v745 = vpack.c.b16 %v584, %v577
    %v746 = vpack.c.b16 %v585, %v578
    %v747 = vpack.c.b16 %v593, %v586
    %v748 = vpack.c.b16 %v594, %v587
    %v749 = vpack.c.b16 %v595, %v588
    %v750 = vpack.c.b16 %v596, %v589
    %v751 = vpack.c.b16 %v597, %v590
    %v752 = vpack.c.b16 %v598, %v591
    %v753 = vpack.c.b16 %v599, %v592
    %v754 = vpack.c.b16 %v607, %v600
    %v755 = vpack.c.b16 %v608, %v601
    %v756 = vpack.c.b16 %v609, %v602
    %v757 = vpack.c.b16 %v610, %v603
    %v758 = vpack.c.b16 %v611, %v604
    %v759 = vpack.c.b16 %v612, %v605
    %v760 = vpack.c.b16 %v613, %v606
    %v761 = vpack.c.b16 %v621, %v614
    %v762 = vpack.c.b16 %v622, %v615
    %v763 = vpack.c.b16 %v623, %v616
    %v764 = vpack.c.b16 %v624, %v617
    %v765 = vpack.c.b16 %v625, %v618
    %v766 = vpack.c.b16 %v626, %v619
    %v767 = vpack.c.b16 %v627, %v620
    %v768 = vpack.c.b16 %v635, %v628
    %v769 = vpack.c.b16 %v636, %v629
    %v770 = vpack.c.b16 %v637, %v630
    %v771 = vpack.c.b16 %v638, %v631
    %v772 = vpack.c.b16 %v639, %v632
    %v773 = vpack.c.b16 %v640, %v633
    %v774 = vpack.c.b16 %v641, %v634
    %v775 = vpack.c.b16 %v649, %v642
    %v776 = vpack.c.b16 %v650, %v643
    %v777 = vpack.c.b16 %v651, %v644
    %v778 = vpack.c.b16 %v652, %v645
    %v779 = vpack.c.b16 %v653, %v646
    %v780 = vpack.c.b16 %v654, %v647
    %v781 = vpack.c.b16 %v655, %v648
    %v782 = vpack.c.b16 %v663, %v656
    %v783 = vpack.c.b16 %v664, %v657
    %v784 = vpack.c.b16 %v665, %v658
    %v785 = vpack.c.b16 %v666, %v659
    %v786 = vpack.c.b16 %v667, %v660
    %v787 = vpack.c.b16 %v668, %v661
    %v788 = vpack.c.b16 %v669, %v662
    %v789 = vpack.c.b16 %v677, %v670
    %v790 = vpack.c.b16 %v678, %v671
    %v791 = vpack.c.b16 %v679, %v672
    %v792 = vpack.c.b16 %v680, %v673
    %v793 = vpack.c.b16 %v681, %v674
    %v794 = vpack.c.b16 %v682, %v675
    %v795 = vpack.c.b16 %v683, %v676
    %908 = vmatpush.bf16.msra.mxu0 %v733
    %909 = vmatpush.bf16.msra.mxu0 %v726
    %910 = vmatpush.bf16.msra.mxu0 %v719
    %911 = vmatpush.bf16.msra.mxu0 %v712
    %912 = vmatpush.bf16.msra.mxu0 %v705
    %913 = vmatpush.bf16.msra.mxu0 %v698
    %914 = vmatpush.bf16.msra.mxu0 %v691
    %915 = vmatpush.bf16.msra.mxu0 %v684
    %916 = vmatmul.bf16.gmra.mxu0 %v186
    %v917 = vpop.f32.mrf.mxu0
    %v918 = vadd.f32 %v318, %v917
    %v919 = vpop.f32.mrf.mxu0
    %920 = vdwg.mxu0
    %921 = vmatpush.bf16.msra.mxu0 %v789
    %922 = vmatpush.bf16.msra.mxu0 %v782
    %923 = vmatpush.bf16.msra.mxu0 %v775
    %924 = vmatpush.bf16.msra.mxu0 %v768
    %925 = vmatpush.bf16.msra.mxu0 %v761
    %926 = vmatpush.bf16.msra.mxu0 %v754
    %927 = vmatpush.bf16.msra.mxu0 %v747
    %928 = vmatpush.bf16.msra.mxu0 %v740
    %929 = vmatmul.bf16.gmra.mxu0 %v187
    %v930 = vpop.f32.mrf.mxu0
    %v931 = vadd.f32 %v918, %v930
    %v932 = vpop.f32.mrf.mxu0
    %933 = vdwg.mxu0
    %934 = vmatpush.bf16.msra.mxu0 %v734
    %935 = vmatpush.bf16.msra.mxu0 %v727
    %936 = vmatpush.bf16.msra.mxu0 %v720
    %937 = vmatpush.bf16.msra.mxu0 %v713
    %938 = vmatpush.bf16.msra.mxu0 %v706
    %939 = vmatpush.bf16.msra.mxu0 %v699
    %940 = vmatpush.bf16.msra.mxu0 %v692
    %941 = vmatpush.bf16.msra.mxu0 %v685
    %942 = vmatmul.bf16.gmra.mxu0 %v186
    %v943 = vpop.f32.mrf.mxu0
    %v944 = vadd.f32 %v319, %v943
    %v945 = vpop.f32.mrf.mxu0
    %946 = vdwg.mxu0
    %947 = vmatpush.bf16.msra.mxu0 %v790
    %948 = vmatpush.bf16.msra.mxu0 %v783
    %949 = vmatpush.bf16.msra.mxu0 %v776
    %950 = vmatpush.bf16.msra.mxu0 %v769
    %951 = vmatpush.bf16.msra.mxu0 %v762
    %952 = vmatpush.bf16.msra.mxu0 %v755
    %953 = vmatpush.bf16.msra.mxu0 %v748
    %954 = vmatpush.bf16.msra.mxu0 %v741
    %955 = vmatmul.bf16.gmra.mxu0 %v187
    %v956 = vpop.f32.mrf.mxu0
    %v957 = vadd.f32 %v944, %v956
    %v958 = vpop.f32.mrf.mxu0
    %959 = vdwg.mxu0
    %960 = vmatpush.bf16.msra.mxu0 %v735
    %961 = vmatpush.bf16.msra.mxu0 %v728
    %962 = vmatpush.bf16.msra.mxu0 %v721
    %963 = vmatpush.bf16.msra.mxu0 %v714
    %964 = vmatpush.bf16.msra.mxu0 %v707
    %965 = vmatpush.bf16.msra.mxu0 %v700
    %966 = vmatpush.bf16.msra.mxu0 %v693
    %967 = vmatpush.bf16.msra.mxu0 %v686
    %968 = vmatmul.bf16.gmra.mxu0 %v186
    %v969 = vpop.f32.mrf.mxu0
    %v970 = vadd.f32 %v320, %v969
    %v971 = vpop.f32.mrf.mxu0
    %972 = vdwg.mxu0
    %973 = vmatpush.bf16.msra.mxu0 %v791
    %974 = vmatpush.bf16.msra.mxu0 %v784
    %975 = vmatpush.bf16.msra.mxu0 %v777
    %976 = vmatpush.bf16.msra.mxu0 %v770
    %977 = vmatpush.bf16.msra.mxu0 %v763
    %978 = vmatpush.bf16.msra.mxu0 %v756
    %979 = vmatpush.bf16.msra.mxu0 %v749
    %980 = vmatpush.bf16.msra.mxu0 %v742
    %981 = vmatmul.bf16.gmra.mxu0 %v187
    %v982 = vpop.f32.mrf.mxu0
    %v983 = vadd.f32 %v970, %v982
    %v984 = vpop.f32.mrf.mxu0
    %985 = vdwg.mxu0
    %986 = vmatpush.bf16.msra.mxu0 %v736
    %987 = vmatpush.bf16.msra.mxu0 %v729
    %988 = vmatpush.bf16.msra.mxu0 %v722
    %989 = vmatpush.bf16.msra.mxu0 %v715
    %990 = vmatpush.bf16.msra.mxu0 %v708
    %991 = vmatpush.bf16.msra.mxu0 %v701
    %992 = vmatpush.bf16.msra.mxu0 %v694
    %993 = vmatpush.bf16.msra.mxu0 %v687
    %994 = vmatmul.bf16.gmra.mxu0 %v186
    %v995 = vpop.f32.mrf.mxu0
    %v996 = vadd.f32 %v321, %v995
    %v997 = vpop.f32.mrf.mxu0
    %998 = vdwg.mxu0
    %999 = vmatpush.bf16.msra.mxu0 %v792
    %1000 = vmatpush.bf16.msra.mxu0 %v785
    %1001 = vmatpush.bf16.msra.mxu0 %v778
    %1002 = vmatpush.bf16.msra.mxu0 %v771
    %1003 = vmatpush.bf16.msra.mxu0 %v764
    %1004 = vmatpush.bf16.msra.mxu0 %v757
    %1005 = vmatpush.bf16.msra.mxu0 %v750
    %1006 = vmatpush.bf16.msra.mxu0 %v743
    %1007 = vmatmul.bf16.gmra.mxu0 %v187
    %v1008 = vpop.f32.mrf.mxu0
    %v1009 = vadd.f32 %v996, %v1008
    %v1010 = vpop.f32.mrf.mxu0
    %1011 = vdwg.mxu0
    %1012 = vmatpush.bf16.msra.mxu0 %v737
    %1013 = vmatpush.bf16.msra.mxu0 %v730
    %1014 = vmatpush.bf16.msra.mxu0 %v723
    %1015 = vmatpush.bf16.msra.mxu0 %v716
    %1016 = vmatpush.bf16.msra.mxu0 %v709
    %1017 = vmatpush.bf16.msra.mxu0 %v702
    %1018 = vmatpush.bf16.msra.mxu0 %v695
    %1019 = vmatpush.bf16.msra.mxu0 %v688
    %1020 = vmatmul.bf16.gmra.mxu0 %v186
    %v1021 = vpop.f32.mrf.mxu0
    %v1022 = vadd.f32 %v322, %v1021
    %v1023 = vpop.f32.mrf.mxu0
    %1024 = vdwg.mxu0
    %1025 = vmatpush.bf16.msra.mxu0 %v793
    %1026 = vmatpush.bf16.msra.mxu0 %v786
    %1027 = vmatpush.bf16.msra.mxu0 %v779
    %1028 = vmatpush.bf16.msra.mxu0 %v772
    %1029 = vmatpush.bf16.msra.mxu0 %v765
    %1030 = vmatpush.bf16.msra.mxu0 %v758
    %1031 = vmatpush.bf16.msra.mxu0 %v751
    %1032 = vmatpush.bf16.msra.mxu0 %v744
    %1033 = vmatmul.bf16.gmra.mxu0 %v187
    %v1034 = vpop.f32.mrf.mxu0
    %v1035 = vadd.f32 %v1022, %v1034
    %v1036 = vpop.f32.mrf.mxu0
    %1037 = vdwg.mxu0
    %1038 = vmatpush.bf16.msra.mxu0 %v738
    %1039 = vmatpush.bf16.msra.mxu0 %v731
    %1040 = vmatpush.bf16.msra.mxu0 %v724
    %1041 = vmatpush.bf16.msra.mxu0 %v717
    %1042 = vmatpush.bf16.msra.mxu0 %v710
    %1043 = vmatpush.bf16.msra.mxu0 %v703
    %1044 = vmatpush.bf16.msra.mxu0 %v696
    %1045 = vmatpush.bf16.msra.mxu0 %v689
    %1046 = vmatmul.bf16.gmra.mxu0 %v186
    %v1047 = vpop.f32.mrf.mxu0
    %v1048 = vadd.f32 %v323, %v1047
    %v1049 = vpop.f32.mrf.mxu0
    %1050 = vdwg.mxu0
    %1051 = vmatpush.bf16.msra.mxu0 %v794
    %1052 = vmatpush.bf16.msra.mxu0 %v787
    %1053 = vmatpush.bf16.msra.mxu0 %v780
    %1054 = vmatpush.bf16.msra.mxu0 %v773
    %1055 = vmatpush.bf16.msra.mxu0 %v766
    %1056 = vmatpush.bf16.msra.mxu0 %v759
    %1057 = vmatpush.bf16.msra.mxu0 %v752
    %1058 = vmatpush.bf16.msra.mxu0 %v745
    %1059 = vmatmul.bf16.gmra.mxu0 %v187
    %v1060 = vpop.f32.mrf.mxu0
    %v1061 = vadd.f32 %v1048, %v1060
    %v1062 = vpop.f32.mrf.mxu0
    %1063 = vdwg.mxu0
    %1064 = vmatpush.bf16.msra.mxu0 %v739
    %1065 = vmatpush.bf16.msra.mxu0 %v732
    %1066 = vmatpush.bf16.msra.mxu0 %v725
    %1067 = vmatpush.bf16.msra.mxu0 %v718
    %1068 = vmatpush.bf16.msra.mxu0 %v711
    %1069 = vmatpush.bf16.msra.mxu0 %v704
    %1070 = vmatpush.bf16.msra.mxu0 %v697
    %1071 = vmatpush.bf16.msra.mxu0 %v690
    %1072 = vmatmul.bf16.gmra.mxu0 %v186
    %v1073 = vpop.f32.mrf.mxu0
    %v1074 = vadd.f32 %v324, %v1073
    %v1075 = vpop.f32.mrf.mxu0
    %1076 = vdwg.mxu0
    %1077 = vmatpush.bf16.msra.mxu0 %v795
    %1078 = vmatpush.bf16.msra.mxu0 %v788
    %1079 = vmatpush.bf16.msra.mxu0 %v781
    %1080 = vmatpush.bf16.msra.mxu0 %v774
    %1081 = vmatpush.bf16.msra.mxu0 %v767
    %1082 = vmatpush.bf16.msra.mxu0 %v760
    %1083 = vmatpush.bf16.msra.mxu0 %v753
    %1084 = vmatpush.bf16.msra.mxu0 %v746
    %1085 = vmatmul.bf16.gmra.mxu0 %v187
    %v1086 = vpop.f32.mrf.mxu0
    %v1087 = vadd.f32 %v1074, %v1086
    %v1088 = vpop.f32.mrf.mxu0
    %1089 = vdwg.mxu0
    %v1090 = vtanh.pop %v931
    %v1091 = vtanh.pop %v957
    %v1092 = vtanh.pop %v983
    %v1093 = vtanh.pop %v1009
    %v1094 = vtanh.pop %v1035
    %v1095 = vtanh.pop %v1061
    %v1096 = vtanh.pop %v1087
    %v1097 = vpack.c.bf16 %v1091, %v1090
    %v1098 = vpack.c.bf16 %v1093, %v1092
    %v1099 = vpack.c.bf16 %v1095, %v1094
    %v1100 = vpack.c.bf16 %v1096, %v1096
    %1101 = vst [vmem:[#allocation11] sm:$0xff] %v1097
    %1102 = vst [vmem:[#allocation11 + $0x8] sm:$0xff] %v1098
    %1103 = vst [vmem:[#allocation11 + $0x10] sm:$0xff] %v1099
    %1104 = vst [vmem:[#allocation11 + $0x18] sm:$0xf] %v1100
    // Predicated region
    $region42: #{apply.1} parent=1 // pred_check
      _
    $region43: #{apply.1} parent=1 // pred_check_branch
      %1106 = sbr.rel (0) target = $region45
    $region44: #{apply.1} parent=1 // pred_region
      %1108 = vsyncadd [#allocation4], 0
      %s1110 = sshll.u32 [#allocation11], 4
      %s1111 = int_to_ptr.vmem [resolvable:$true] %s1110
      %s1112 = sshll.u32 %s5, 4
      %s1113 = int_to_ptr.hbm [resolvable:$true] %s1112
      %1115 = dma.vmem_to_hbm [thread:$0]  %s1111, 448, %s1113, [#allocation4]
    $region45: #{apply.1} parent=1 // pred_fallthru
      _
    // Predicated region
    $region46: #{apply.1} parent=1 // pred_check
      _
    $region47: #{apply.1} parent=1 // pred_check_branch
      %1117 = sbr.rel (0) target = $region49
    $region48: #{apply.1} parent=1 // pred_region
      %1119 = dma.done [#allocation4], 448
    $region49: #{apply.1} parent=1 // pred_fallthru
      _
    %1120 = vsyncpa [#allocation3], 1
    %1121 = vsyncpa [#allocation6], 1
    %1122 = vsyncpa [#allocation9], 1
    %1123 = vsyncpa [#allocation4], 1

</llo_original>
